<compile_context>
chip_gen: v7x
topology: tpu7x:2x2x1
jax: 0.10.0
libtpu: 0.0.40
codegen_flags: <defaults>
</compile_context>

<pallas_src>
import jax
import jax.numpy as jnp
from jax.experimental import pallas as pl
from jax.experimental.pallas import tpu as pltpu

# Logical layer sizes of the PyTorch module and their lane-padded versions.
LAYER_DIMS = [30, 90, 180, 180, 180, 90, 1]
PAD_DIMS = [128, 128, 256, 256, 256, 128, 128]

TB_DEFAULT = 1024  # batch tile (rows per grid step); multiple of 8, sweepable.


def _round_up(n, m):
    return ((n + m - 1) // m) * m


def _choose_tile(batch, tb_request):
    """Pick a batch tile: multiple of 8, <= tb_request, and (if the batch is
    large enough) small enough that the grid has >= 2 steps for v7x megacore."""
    b8 = _round_up(batch, 8)
    tb = min(max(tb_request, 8), b8)
    tb = _round_up(tb, 8)
    if tb >= b8 and b8 >= 16:
        # Would collapse to grid=(1,): split into two tiles instead.
        tb = _round_up((b8 + 1) // 2, 8)
    return tb


def _mlp_kernel(x_ref,
                w1_ref, b1_ref,
                w2_ref, b2_ref,
                w3_ref, b3_ref,
                w4_ref, b4_ref,
                w5_ref, b5_ref,
                w6_ref, b6_ref,
                o_ref):
    """One batch tile of the MLP; weights are VMEM-resident across tiles."""

    def linear(h_bf16, w_ref, b_ref):
        # bf16 MXU operands, f32 accumulation; bias-add in f32 on the VPU.
        z = jnp.dot(h_bf16, w_ref[...], preferred_element_type=jnp.float32)
        return z + b_ref[...]           # bias is (1, out_pad) -> broadcasts

    # x_ref is already bf16 -> feed the MXU directly (no in-kernel cast).
    h = jnp.maximum(linear(x_ref[...], w1_ref, b1_ref), 0.0)
    h = jnp.maximum(linear(h.astype(jnp.bfloat16), w2_ref, b2_ref), 0.0)
    h = jnp.maximum(linear(h.astype(jnp.bfloat16), w3_ref, b3_ref), 0.0)
    h = jnp.maximum(linear(h.astype(jnp.bfloat16), w4_ref, b4_ref), 0.0)
    h = jnp.maximum(linear(h.astype(jnp.bfloat16), w5_ref, b5_ref), 0.0)

    # Final layer: Linear(90,1) (padded to 128 lanes) + Sigmoid.
    z = linear(h.astype(jnp.bfloat16), w6_ref, b6_ref)
    sig = pl.reciprocal(1.0 + jnp.exp(-z), approx=True)   # EUP exp + EUP rcp
    o_ref[...] = sig.astype(o_ref.dtype)


def init_params(key, dtype=jnp.float32):
    """nn.Linear-style init; weights stored (out, in) like PyTorch."""
    params = []
    for i in range(len(LAYER_DIMS) - 1):
        fan_in, fan_out = LAYER_DIMS[i], LAYER_DIMS[i + 1]
        key, kw, kb = jax.random.split(key, 3)
        bound = 1.0 / jnp.sqrt(jnp.float32(fan_in))
        w = jax.random.uniform(kw, (fan_out, fan_in), dtype, -bound, bound)
        b = jax.random.uniform(kb, (fan_out,), dtype, -bound, bound)
        params.append((w, b))
    return params


def prepare_params(params):
    """One-time (hoisted) transpose + zero-pad + cast of all weights/biases.

    Weights become bf16 (in_pad, out_pad) MXU operands, biases stay f32
    (1, out_pad).  Call once and reuse across forward calls.
    """
    flat = []
    for li, (w, b) in enumerate(params):
        in_p, out_p = PAD_DIMS[li], PAD_DIMS[li + 1]
        w_t = jnp.transpose(w).astype(jnp.float32)           # (in, out)
        w_pad = jnp.zeros((in_p, out_p), jnp.float32)
        w_pad = w_pad.at[:w_t.shape[0], :w_t.shape[1]].set(w_t)
        b_pad = jnp.zeros((1, out_p), jnp.float32)
        b_pad = b_pad.at[0, :b.shape[0]].set(b.astype(jnp.float32))
        flat.append(w_pad.astype(jnp.bfloat16))
        flat.append(b_pad)
    return tuple(flat)


def neural_net_forward(x, padded_params, tb=None):
    """Runs the tiled Pallas MLP kernel on pre-padded (prepare_params) params."""
    B, in_dim = x.shape
    assert in_dim == LAYER_DIMS[0], in_dim
    out_dtype = x.dtype

    tb = _choose_tile(B, TB_DEFAULT if tb is None else tb)
    B_pad = _round_up(B, tb)
    grid = (B_pad // tb,)

    # Zero-pad the input: batch -> B_pad rows, features 30 -> 128 lanes.
    # bf16 in the wrapper so the streaming DMA is half the f32 size.
    x_pad = jnp.zeros((B_pad, PAD_DIMS[0]), jnp.bfloat16)
    x_pad = x_pad.at[:B, :in_dim].set(x.astype(jnp.bfloat16))

    in_specs = [pl.BlockSpec((tb, PAD_DIMS[0]), lambda i: (i, 0))]
    for li in range(len(LAYER_DIMS) - 1):
        in_p, out_p = PAD_DIMS[li], PAD_DIMS[li + 1]
        in_specs.append(pl.BlockSpec((in_p, out_p), lambda i: (0, 0)))
        in_specs.append(pl.BlockSpec((1, out_p), lambda i: (0, 0)))
    out_spec = pl.BlockSpec((tb, PAD_DIMS[-1]), lambda i: (i, 0))

    flops = 2 * B_pad * sum(PAD_DIMS[i] * PAD_DIMS[i + 1]
                            for i in range(len(LAYER_DIMS) - 1))
    bytes_accessed = (x_pad.size * 2 + B_pad * PAD_DIMS[-1] * 2
                      + sum(int(a.size) * int(a.dtype.itemsize)
                            for a in padded_params))
    cost = pl.CostEstimate(flops=int(flops),
                           transcendentals=int(2 * B_pad * PAD_DIMS[-1]),
                           bytes_accessed=int(bytes_accessed))

    out_pad = pl.pallas_call(
        _mlp_kernel,
        out_shape=jax.ShapeDtypeStruct((B_pad, PAD_DIMS[-1]), jnp.bfloat16),
        grid=grid,
        in_specs=in_specs,
        out_specs=out_spec,
        compiler_params=pltpu.CompilerParams(
            dimension_semantics=("parallel",)),
        cost_estimate=cost,
    )(x_pad, *padded_params)

    # Strip batch padding and the padded sigmoid lanes.
    return out_pad[:B, :LAYER_DIMS[-1]].astype(out_dtype)


def _reference_forward_f32(x, params):
    """Pure f32 reference (exact PyTorch semantics)."""
    h = x.astype(jnp.float32)
    n = len(params)
    for i, (w, b) in enumerate(params):
        h = h @ w.T.astype(jnp.float32) + b.astype(jnp.float32)
        h = jnp.maximum(h, 0.0) if i < n - 1 else jax.nn.sigmoid(h)
    return h.astype(x.dtype)


def _reference_forward_bf16(x, params):
    """Reference using the same bf16-operand / f32-accumulate math as kernel."""
    h = x.astype(jnp.float32)
    n = len(params)
    for i, (w, b) in enumerate(params):
        z = jnp.dot(h.astype(jnp.bfloat16),
                    jnp.transpose(w).astype(jnp.bfloat16),
                    preferred_element_type=jnp.float32)
        h = z + b.astype(jnp.float32)
        h = jnp.maximum(h, 0.0) if i < n - 1 else 1.0 / (1.0 + jnp.exp(-h))
    return h.astype(x.dtype)


if __name__ == "__main__":
    key = jax.random.PRNGKey(0)
    key, kx = jax.random.split(key)

    batch = 8
    x = jax.random.normal(kx, (batch, 30), dtype=jnp.float32)
    params = init_params(key)

    # Hoisted, one-time parameter padding (per the performance review).
    padded_params = prepare_params(params)
    padded_params = jax.block_until_ready(padded_params)

    forward = jax.jit(neural_net_forward)
    out = forward(x, padded_params)
    out = jax.block_until_ready(out)
    assert out.shape == (batch, 1), out.shape

    # Tight check against a reference that uses the same bf16 MXU math
    # (kernel adds bf16 output rounding + approx reciprocal, both << 2e-3).
    ref_bf16 = _reference_forward_bf16(x, params)
    err_bf16 = jnp.max(jnp.abs(out - ref_bf16))
    assert jnp.allclose(out, ref_bf16, atol=4e-3, rtol=4e-3), (
        f"bf16-ref max abs err {err_bf16}")

    # Looser check against the exact f32 PyTorch-equivalent forward.
    ref_f32 = _reference_forward_f32(x, params)
    err_f32 = jnp.max(jnp.abs(out - ref_f32))
    assert jnp.allclose(out, ref_f32, atol=3e-2, rtol=3e-2), (
        f"f32-ref max abs err {err_f32}")

    print("KERNEL_OK")
</pallas_src>

<mosaic_0001>
module attributes {stable_mosaic.version = 11 : i64} {
  func.func @_mlp_kernel(%arg0: i32, %arg1: memref<8x128xbf16, #tpu.memory_space<vmem>>, %arg2: memref<128x128xbf16, #tpu.memory_space<vmem>>, %arg3: memref<1x128xf32, #tpu.memory_space<vmem>>, %arg4: memref<128x256xbf16, #tpu.memory_space<vmem>>, %arg5: memref<1x256xf32, #tpu.memory_space<vmem>>, %arg6: memref<256x256xbf16, #tpu.memory_space<vmem>>, %arg7: memref<1x256xf32, #tpu.memory_space<vmem>>, %arg8: memref<256x256xbf16, #tpu.memory_space<vmem>>, %arg9: memref<1x256xf32, #tpu.memory_space<vmem>>, %arg10: memref<256x128xbf16, #tpu.memory_space<vmem>>, %arg11: memref<1x128xf32, #tpu.memory_space<vmem>>, %arg12: memref<128x128xbf16, #tpu.memory_space<vmem>>, %arg13: memref<1x128xf32, #tpu.memory_space<vmem>>, %arg14: memref<8x128xbf16, #tpu.memory_space<vmem>>) attributes {dimension_semantics = [#tpu.dimension_semantics<parallel>], iteration_bounds = array<i64: 1>, scalar_prefetch = 0 : i64, scratch_operands = 0 : i64, tpu.core_type = #tpu.core_type<tc>, window_params = [{transform_indices = @transform_0, window_bounds = array<i64: 8, 128>}, {pipeline_mode = #tpu.pipeline_mode<synchronous>, transform_indices = @transform_1, window_bounds = array<i64: 128, 128>}, {pipeline_mode = #tpu.pipeline_mode<synchronous>, transform_indices = @transform_2, window_bounds = array<i64: 1, 128>}, {pipeline_mode = #tpu.pipeline_mode<synchronous>, transform_indices = @transform_3, window_bounds = array<i64: 128, 256>}, {pipeline_mode = #tpu.pipeline_mode<synchronous>, transform_indices = @transform_4, window_bounds = array<i64: 1, 256>}, {pipeline_mode = #tpu.pipeline_mode<synchronous>, transform_indices = @transform_5, window_bounds = array<i64: 256, 256>}, {pipeline_mode = #tpu.pipeline_mode<synchronous>, transform_indices = @transform_6, window_bounds = array<i64: 1, 256>}, {pipeline_mode = #tpu.pipeline_mode<synchronous>, transform_indices = @transform_7, window_bounds = array<i64: 256, 256>}, {pipeline_mode = #tpu.pipeline_mode<synchronous>, transform_indices = @transform_8, window_bounds = array<i64: 1, 256>}, {pipeline_mode = #tpu.pipeline_mode<synchronous>, transform_indices = @transform_9, window_bounds = array<i64: 256, 128>}, {pipeline_mode = #tpu.pipeline_mode<synchronous>, transform_indices = @transform_10, window_bounds = array<i64: 1, 128>}, {pipeline_mode = #tpu.pipeline_mode<synchronous>, transform_indices = @transform_11, window_bounds = array<i64: 128, 128>}, {pipeline_mode = #tpu.pipeline_mode<synchronous>, transform_indices = @transform_12, window_bounds = array<i64: 1, 128>}, {transform_indices = @transform_13, window_bounds = array<i64: 8, 128>}]} {
    %c0 = arith.constant 0 : index
    %c0_0 = arith.constant 0 : index
    %0 = vector.load %arg1[%c0, %c0_0] : memref<8x128xbf16, #tpu.memory_space<vmem>>, vector<8x128xbf16>
    %c0_1 = arith.constant 0 : index
    %c0_2 = arith.constant 0 : index
    %1 = vector.load %arg2[%c0_1, %c0_2] : memref<128x128xbf16, #tpu.memory_space<vmem>>, vector<128x128xbf16>
    %cst = arith.constant dense<0.000000e+00> : vector<8x128xf32>
    %2 = tpu.matmul %0, %1, %cst {dimension_numbers = #tpu.dot_dimension_numbers<[1], [0], [0], [1], [0, 0, 1, 1], [], []>} : vector<8x128xbf16>, vector<128x128xbf16>, vector<8x128xf32> -> vector<8x128xf32>
    %c0_3 = arith.constant 0 : index
    %c0_4 = arith.constant 0 : index
    %3 = vector.load %arg3[%c0_3, %c0_4] : memref<1x128xf32, #tpu.memory_space<vmem>>, vector<1x128xf32>
    %4 = vector.broadcast %3 : vector<1x128xf32> to vector<8x128xf32>
    %5 = arith.addf %2, %4 : vector<8x128xf32>
    %cst_5 = arith.constant 0.000000e+00 : f32
    %6 = vector.broadcast %cst_5 : f32 to vector<8x128xf32>
    %7 = arith.maximumf %5, %6 : vector<8x128xf32>
    %8 = arith.truncf %7 : vector<8x128xf32> to vector<8x128xbf16>
    %c0_6 = arith.constant 0 : index
    %c0_7 = arith.constant 0 : index
    %9 = vector.load %arg4[%c0_6, %c0_7] : memref<128x256xbf16, #tpu.memory_space<vmem>>, vector<128x256xbf16>
    %cst_8 = arith.constant dense<0.000000e+00> : vector<8x256xf32>
    %10 = tpu.matmul %8, %9, %cst_8 {dimension_numbers = #tpu.dot_dimension_numbers<[1], [0], [0], [1], [0, 0, 1, 1], [], []>} : vector<8x128xbf16>, vector<128x256xbf16>, vector<8x256xf32> -> vector<8x256xf32>
    %c0_9 = arith.constant 0 : index
    %c0_10 = arith.constant 0 : index
    %11 = vector.load %arg5[%c0_9, %c0_10] : memref<1x256xf32, #tpu.memory_space<vmem>>, vector<1x256xf32>
    %12 = vector.broadcast %11 : vector<1x256xf32> to vector<8x256xf32>
    %13 = arith.addf %10, %12 : vector<8x256xf32>
    %cst_11 = arith.constant 0.000000e+00 : f32
    %14 = vector.broadcast %cst_11 : f32 to vector<8x256xf32>
    %15 = arith.maximumf %13, %14 : vector<8x256xf32>
    %16 = arith.truncf %15 : vector<8x256xf32> to vector<8x256xbf16>
    %c0_12 = arith.constant 0 : index
    %c0_13 = arith.constant 0 : index
    %17 = vector.load %arg6[%c0_12, %c0_13] : memref<256x256xbf16, #tpu.memory_space<vmem>>, vector<256x256xbf16>
    %cst_14 = arith.constant dense<0.000000e+00> : vector<8x256xf32>
    %18 = tpu.matmul %16, %17, %cst_14 {dimension_numbers = #tpu.dot_dimension_numbers<[1], [0], [0], [1], [0, 0, 1, 1], [], []>} : vector<8x256xbf16>, vector<256x256xbf16>, vector<8x256xf32> -> vector<8x256xf32>
    %c0_15 = arith.constant 0 : index
    %c0_16 = arith.constant 0 : index
    %19 = vector.load %arg7[%c0_15, %c0_16] : memref<1x256xf32, #tpu.memory_space<vmem>>, vector<1x256xf32>
    %20 = vector.broadcast %19 : vector<1x256xf32> to vector<8x256xf32>
    %21 = arith.addf %18, %20 : vector<8x256xf32>
    %cst_17 = arith.constant 0.000000e+00 : f32
    %22 = vector.broadcast %cst_17 : f32 to vector<8x256xf32>
    %23 = arith.maximumf %21, %22 : vector<8x256xf32>
    %24 = arith.truncf %23 : vector<8x256xf32> to vector<8x256xbf16>
    %c0_18 = arith.constant 0 : index
    %c0_19 = arith.constant 0 : index
    %25 = vector.load %arg8[%c0_18, %c0_19] : memref<256x256xbf16, #tpu.memory_space<vmem>>, vector<256x256xbf16>
    %cst_20 = arith.constant dense<0.000000e+00> : vector<8x256xf32>
    %26 = tpu.matmul %24, %25, %cst_20 {dimension_numbers = #tpu.dot_dimension_numbers<[1], [0], [0], [1], [0, 0, 1, 1], [], []>} : vector<8x256xbf16>, vector<256x256xbf16>, vector<8x256xf32> -> vector<8x256xf32>
    %c0_21 = arith.constant 0 : index
    %c0_22 = arith.constant 0 : index
    %27 = vector.load %arg9[%c0_21, %c0_22] : memref<1x256xf32, #tpu.memory_space<vmem>>, vector<1x256xf32>
    %28 = vector.broadcast %27 : vector<1x256xf32> to vector<8x256xf32>
    %29 = arith.addf %26, %28 : vector<8x256xf32>
    %cst_23 = arith.constant 0.000000e+00 : f32
    %30 = vector.broadcast %cst_23 : f32 to vector<8x256xf32>
    %31 = arith.maximumf %29, %30 : vector<8x256xf32>
    %32 = arith.truncf %31 : vector<8x256xf32> to vector<8x256xbf16>
    %c0_24 = arith.constant 0 : index
    %c0_25 = arith.constant 0 : index
    %33 = vector.load %arg10[%c0_24, %c0_25] : memref<256x128xbf16, #tpu.memory_space<vmem>>, vector<256x128xbf16>
    %cst_26 = arith.constant dense<0.000000e+00> : vector<8x128xf32>
    %34 = tpu.matmul %32, %33, %cst_26 {dimension_numbers = #tpu.dot_dimension_numbers<[1], [0], [0], [1], [0, 0, 1, 1], [], []>} : vector<8x256xbf16>, vector<256x128xbf16>, vector<8x128xf32> -> vector<8x128xf32>
    %c0_27 = arith.constant 0 : index
    %c0_28 = arith.constant 0 : index
    %35 = vector.load %arg11[%c0_27, %c0_28] : memref<1x128xf32, #tpu.memory_space<vmem>>, vector<1x128xf32>
    %36 = vector.broadcast %35 : vector<1x128xf32> to vector<8x128xf32>
    %37 = arith.addf %34, %36 : vector<8x128xf32>
    %cst_29 = arith.constant 0.000000e+00 : f32
    %38 = vector.broadcast %cst_29 : f32 to vector<8x128xf32>
    %39 = arith.maximumf %37, %38 : vector<8x128xf32>
    %40 = arith.truncf %39 : vector<8x128xf32> to vector<8x128xbf16>
    %c0_30 = arith.constant 0 : index
    %c0_31 = arith.constant 0 : index
    %41 = vector.load %arg12[%c0_30, %c0_31] : memref<128x128xbf16, #tpu.memory_space<vmem>>, vector<128x128xbf16>
    %cst_32 = arith.constant dense<0.000000e+00> : vector<8x128xf32>
    %42 = tpu.matmul %40, %41, %cst_32 {dimension_numbers = #tpu.dot_dimension_numbers<[1], [0], [0], [1], [0, 0, 1, 1], [], []>} : vector<8x128xbf16>, vector<128x128xbf16>, vector<8x128xf32> -> vector<8x128xf32>
    %c0_33 = arith.constant 0 : index
    %c0_34 = arith.constant 0 : index
    %43 = vector.load %arg13[%c0_33, %c0_34] : memref<1x128xf32, #tpu.memory_space<vmem>>, vector<1x128xf32>
    %44 = vector.broadcast %43 : vector<1x128xf32> to vector<8x128xf32>
    %45 = arith.addf %42, %44 : vector<8x128xf32>
    %cst_35 = arith.constant 0.000000e+00 : f32
    %46 = vector.broadcast %cst_35 : f32 to vector<8x128xf32>
    %47 = arith.subf %46, %45 : vector<8x128xf32>
    %48 = math.exp %47 : vector<8x128xf32>
    %cst_36 = arith.constant 1.000000e+00 : f32
    %49 = vector.broadcast %cst_36 : f32 to vector<8x128xf32>
    %50 = arith.addf %49, %48 : vector<8x128xf32>
    %51 = tpu.reciprocal %50 {approx = true} : vector<8x128xf32> -> vector<8x128xf32>
    %52 = arith.truncf %51 : vector<8x128xf32> to vector<8x128xbf16>
    %c0_37 = arith.constant 0 : index
    %c0_38 = arith.constant 0 : index
    %53 = vector.load %arg14[%c0_37, %c0_38] : memref<8x128xbf16, #tpu.memory_space<vmem>>, vector<8x128xbf16>
    tpu.vector_store %arg14[%c0_37, %c0_38], %52 {strides = array<i32>} : memref<8x128xbf16, #tpu.memory_space<vmem>>, vector<8x128xbf16>,
    return
  }
  func.func @transform_0(%arg0: i32) -> (i32, i32) {
    %c0_i32 = arith.constant 0 : i32
    %c0_i32_0 = arith.constant 0 : i32
    return %arg0, %c0_i32 : i32, i32
  }
  func.func @transform_1(%arg0: i32) -> (i32, i32) {
    %c0_i32 = arith.constant 0 : i32
    %c0_i32_0 = arith.constant 0 : i32
    %c0_i32_1 = arith.constant 0 : i32
    return %c0_i32, %c0_i32_0 : i32, i32
  }
  func.func @transform_2(%arg0: i32) -> (i32, i32) {
    %c0_i32 = arith.constant 0 : i32
    %c0_i32_0 = arith.constant 0 : i32
    %c0_i32_1 = arith.constant 0 : i32
    return %c0_i32, %c0_i32_0 : i32, i32
  }
  func.func @transform_3(%arg0: i32) -> (i32, i32) {
    %c0_i32 = arith.constant 0 : i32
    %c0_i32_0 = arith.constant 0 : i32
    %c0_i32_1 = arith.constant 0 : i32
    return %c0_i32, %c0_i32_0 : i32, i32
  }
  func.func @transform_4(%arg0: i32) -> (i32, i32) {
    %c0_i32 = arith.constant 0 : i32
    %c0_i32_0 = arith.constant 0 : i32
    %c0_i32_1 = arith.constant 0 : i32
    return %c0_i32, %c0_i32_0 : i32, i32
  }
  func.func @transform_5(%arg0: i32) -> (i32, i32) {
    %c0_i32 = arith.constant 0 : i32
    %c0_i32_0 = arith.constant 0 : i32
    %c0_i32_1 = arith.constant 0 : i32
    return %c0_i32, %c0_i32_0 : i32, i32
  }
  func.func @transform_6(%arg0: i32) -> (i32, i32) {
    %c0_i32 = arith.constant 0 : i32
    %c0_i32_0 = arith.constant 0 : i32
    %c0_i32_1 = arith.constant 0 : i32
    return %c0_i32, %c0_i32_0 : i32, i32
  }
  func.func @transform_7(%arg0: i32) -> (i32, i32) {
    %c0_i32 = arith.constant 0 : i32
    %c0_i32_0 = arith.constant 0 : i32
    %c0_i32_1 = arith.constant 0 : i32
    return %c0_i32, %c0_i32_0 : i32, i32
  }
  func.func @transform_8(%arg0: i32) -> (i32, i32) {
    %c0_i32 = arith.constant 0 : i32
    %c0_i32_0 = arith.constant 0 : i32
    %c0_i32_1 = arith.constant 0 : i32
    return %c0_i32, %c0_i32_0 : i32, i32
  }
  func.func @transform_9(%arg0: i32) -> (i32, i32) {
    %c0_i32 = arith.constant 0 : i32
    %c0_i32_0 = arith.constant 0 : i32
    %c0_i32_1 = arith.constant 0 : i32
    return %c0_i32, %c0_i32_0 : i32, i32
  }
  func.func @transform_10(%arg0: i32) -> (i32, i32) {
    %c0_i32 = arith.constant 0 : i32
    %c0_i32_0 = arith.constant 0 : i32
    %c0_i32_1 = arith.constant 0 : i32
    return %c0_i32, %c0_i32_0 : i32, i32
  }
  func.func @transform_11(%arg0: i32) -> (i32, i32) {
    %c0_i32 = arith.constant 0 : i32
    %c0_i32_0 = arith.constant 0 : i32
    %c0_i32_1 = arith.constant 0 : i32
    return %c0_i32, %c0_i32_0 : i32, i32
  }
  func.func @transform_12(%arg0: i32) -> (i32, i32) {
    %c0_i32 = arith.constant 0 : i32
    %c0_i32_0 = arith.constant 0 : i32
    %c0_i32_1 = arith.constant 0 : i32
    return %c0_i32, %c0_i32_0 : i32, i32
  }
  func.func @transform_13(%arg0: i32) -> (i32, i32) {
    %c0_i32 = arith.constant 0 : i32
    %c0_i32_0 = arith.constant 0 : i32
    return %arg0, %c0_i32 : i32, i32
  }
}

</mosaic_0001>

<llo_original>
// kernel: neural_net_forward.1
$region0: #{neural_net_forward.1}
  #allocation0 [shape = 'u32[]', space=smem, size = 0x4, offset = 0x4, fixed_abs, tag = 'smem constant byte address 0x4 - core index']
  #allocation1 [shape = 'u32[144,128]{1,0:T(1,128)}', space=vmem, size = 0x12000, scoped, tag = 'internal scratch']
  %s0 = inlined_call_operand.vmem [shape: bf16[8,128], index: 0, kind: input, shape index: {}]
  %s1 = inlined_call_operand.hbm [shape: bf16[128,128], index: 1, kind: input, shape index: {}]
  %s2 = inlined_call_operand.vmem [shape: f32[1,128], index: 2, kind: input, shape index: {}]
  %s3 = inlined_call_operand.hbm [shape: bf16[128,256], index: 3, kind: input, shape index: {}]
  %s4 = inlined_call_operand.vmem [shape: f32[1,256], index: 4, kind: input, shape index: {}]
  %s5 = inlined_call_operand.hbm [shape: bf16[256,256], index: 5, kind: input, shape index: {}]
  %s6 = inlined_call_operand.hbm [shape: f32[1,256], index: 6, kind: input, shape index: {}]
  %s7 = inlined_call_operand.hbm [shape: bf16[256,256], index: 7, kind: input, shape index: {}]
  %s8 = inlined_call_operand.hbm [shape: f32[1,256], index: 8, kind: input, shape index: {}]
  %s9 = inlined_call_operand.hbm [shape: bf16[256,128], index: 9, kind: input, shape index: {}]
  %s10 = inlined_call_operand.hbm [shape: f32[1,128], index: 10, kind: input, shape index: {}]
  %s11 = inlined_call_operand.vmem [shape: bf16[128,128], index: 11, kind: input, shape index: {}]
  %s12 = inlined_call_operand.vmem [shape: f32[1,128], index: 12, kind: input, shape index: {}]
  %s13 = inlined_call_operand.vmem [shape: bf16[8,128], index: 13, kind: output, shape index: {}]
  %s14 = sld [smem:[#allocation0]]
  $region94: #{neural_net_forward.1} parent=0
    _
  %s16 = ssub.s32 1, %s14
  %s17 = scalar_select 0, %s16, %s14
  $region1: #{neural_net_forward.1} parent=0
    #allocation2 [shape = 'u8[32768]{0}', space=vmem, size = 0x8000, scoped, tag = 'input window, operand 1, single buffered']
    #allocation3 [shape = 's32[1]{0}', space=sflag, size = 0x4, scoped, tag = 'scoped memory for neural_net_forward.1']
    #allocation4 [shape = 'u8[65536]{0}', space=vmem, size = 0x10000, scoped, tag = 'input window, operand 3, single buffered']
    #allocation5 [shape = 's32[1]{0}', space=sflag, size = 0x4, scoped, tag = 'scoped memory for neural_net_forward.1']
    #allocation6 [shape = 'u8[131072]{0}', space=vmem, size = 0x20000, scoped, tag = 'input window, operand 5, single buffered']
    #allocation7 [shape = 'u8[1024]{0}', space=vmem, size = 0x400, scoped, tag = 'input window, operand 6, single buffered']
    #allocation8 [shape = 's32[1]{0}', space=sflag, size = 0x4, scoped, tag = 'scoped memory for neural_net_forward.1']
    #allocation9 [shape = 'u8[131072]{0}', space=vmem, size = 0x20000, scoped, tag = 'input window, operand 7, single buffered']
    #allocation10 [shape = 'u8[1024]{0}', space=vmem, size = 0x400, scoped, tag = 'input window, operand 8, single buffered']
    #allocation11 [shape = 's32[1]{0}', space=sflag, size = 0x4, scoped, tag = 'scoped memory for neural_net_forward.1']
    #allocation12 [shape = 'u8[65536]{0}', space=vmem, size = 0x10000, scoped, tag = 'input window, operand 9, single buffered']
    #allocation13 [shape = 'u8[512]{0}', space=vmem, size = 0x400, scoped, tag = 'input window, operand 10, single buffered']
    #allocation14 [shape = 's32[1]{0}', space=sflag, size = 0x4, scoped, tag = 'scoped memory for neural_net_forward.1']
    %18 = vsyncpa [#allocation3], 0
    %19 = vsyncpa [#allocation5], 0
    %20 = vsyncpa [#allocation8], 0
    %21 = vsyncpa [#allocation11], 0
    %22 = vsyncpa [#allocation14], 0
    // Predicated region
    $region2: #{neural_net_forward.1} parent=1 // pred_check
      _
    $region3: #{neural_net_forward.1} parent=1 // pred_check_branch
      %24 = sbr.rel (0) target = $region5
    $region4: #{neural_net_forward.1} parent=1 // pred_region
      _
    $region5: #{neural_net_forward.1} parent=1 // pred_fallthru
      _
    // Predicated region
    $region6: #{neural_net_forward.1} parent=1 // pred_check
      _
    $region7: #{neural_net_forward.1} parent=1 // pred_check_branch
      %26 = sbr.rel (0) target = $region9
    $region8: #{neural_net_forward.1} parent=1 // pred_region
      %s28 = ssub.s32 1024, 1024
      %29 = vsyncadd [#allocation3], %s28
      %s30 = sshll.u32 [#allocation2], 4
      %s31 = int_to_ptr.vmem [resolvable:$true] %s30
      %36 = dma.hbm_to_vmem [thread:$0]  %s1, 1024, %s31, [#allocation3], 64, 64, 4
    $region9: #{neural_net_forward.1} parent=1 // pred_fallthru
      _
    // Predicated region
    $region10: #{neural_net_forward.1} parent=1 // pred_check
      _
    $region11: #{neural_net_forward.1} parent=1 // pred_check_branch
      %38 = sbr.rel (0) target = $region13
    $region12: #{neural_net_forward.1} parent=1 // pred_region
      _
    $region13: #{neural_net_forward.1} parent=1 // pred_fallthru
      _
    // Predicated region
    $region14: #{neural_net_forward.1} parent=1 // pred_check
      _
    $region15: #{neural_net_forward.1} parent=1 // pred_check_branch
      %40 = sbr.rel (0) target = $region17
    $region16: #{neural_net_forward.1} parent=1 // pred_region
      %s42 = ssub.s32 2048, 2048
      %43 = vsyncadd [#allocation5], %s42
      %s44 = sshll.u32 [#allocation4], 4
      %s45 = int_to_ptr.vmem [resolvable:$true] %s44
      %50 = dma.hbm_to_vmem [thread:$0]  %s3, 2048, %s45, [#allocation5], 128, 128, 8
    $region17: #{neural_net_forward.1} parent=1 // pred_fallthru
      _
    // Predicated region
    $region18: #{neural_net_forward.1} parent=1 // pred_check
      _
    $region19: #{neural_net_forward.1} parent=1 // pred_check_branch
      %52 = sbr.rel (0) target = $region21
    $region20: #{neural_net_forward.1} parent=1 // pred_region
      _
    $region21: #{neural_net_forward.1} parent=1 // pred_fallthru
      _
    // Predicated region
    $region22: #{neural_net_forward.1} parent=1 // pred_check
      _
    $region23: #{neural_net_forward.1} parent=1 // pred_check_branch
      %54 = sbr.rel (0) target = $region25
    $region24: #{neural_net_forward.1} parent=1 // pred_region
      %s56 = ssub.s32 4096, 4096
      %57 = vsyncadd [#allocation5], %s56
      %s58 = sshll.u32 [#allocation6], 4
      %s59 = int_to_ptr.vmem [resolvable:$true] %s58
      %64 = dma.hbm_to_vmem [thread:$0]  %s5, 4096, %s59, [#allocation5], 128, 128, 8
    $region25: #{neural_net_forward.1} parent=1 // pred_fallthru
      _
    // Predicated region
    $region26: #{neural_net_forward.1} parent=1 // pred_check
      _
    $region27: #{neural_net_forward.1} parent=1 // pred_check_branch
      %66 = sbr.rel (0) target = $region29
    $region28: #{neural_net_forward.1} parent=1 // pred_region
      %s68 = ssub.s32 32, 32
      %69 = vsyncadd [#allocation8], %s68
      %s71 = sshll.u32 [#allocation7], 4
      %s72 = int_to_ptr.vmem [resolvable:$true] %s71
      %74 = dma.hbm_to_vmem [thread:$0]  %s6, 32, %s72, [#allocation8]
    $region29: #{neural_net_forward.1} parent=1 // pred_fallthru
      _
    // Predicated region
    $region30: #{neural_net_forward.1} parent=1 // pred_check
      _
    $region31: #{neural_net_forward.1} parent=1 // pred_check_branch
      %76 = sbr.rel (0) target = $region33
    $region32: #{neural_net_forward.1} parent=1 // pred_region
      %s78 = ssub.s32 4096, 4096
      %79 = vsyncadd [#allocation8], %s78
      %s80 = sshll.u32 [#allocation9], 4
      %s81 = int_to_ptr.vmem [resolvable:$true] %s80
      %86 = dma.hbm_to_vmem [thread:$0]  %s7, 4096, %s81, [#allocation8], 128, 128, 8
    $region33: #{neural_net_forward.1} parent=1 // pred_fallthru
      _
    // Predicated region
    $region34: #{neural_net_forward.1} parent=1 // pred_check
      _
    $region35: #{neural_net_forward.1} parent=1 // pred_check_branch
      %88 = sbr.rel (0) target = $region37
    $region36: #{neural_net_forward.1} parent=1 // pred_region
      %s90 = ssub.s32 32, 32
      %91 = vsyncadd [#allocation11], %s90
      %s93 = sshll.u32 [#allocation10], 4
      %s94 = int_to_ptr.vmem [resolvable:$true] %s93
      %96 = dma.hbm_to_vmem [thread:$0]  %s8, 32, %s94, [#allocation11]
    $region37: #{neural_net_forward.1} parent=1 // pred_fallthru
      _
    // Predicated region
    $region38: #{neural_net_forward.1} parent=1 // pred_check
      _
    $region39: #{neural_net_forward.1} parent=1 // pred_check_branch
      %98 = sbr.rel (0) target = $region41
    $region40: #{neural_net_forward.1} parent=1 // pred_region
      %s100 = ssub.s32 2048, 2048
      %101 = vsyncadd [#allocation11], %s100
      %s102 = sshll.u32 [#allocation12], 4
      %s103 = int_to_ptr.vmem [resolvable:$true] %s102
      %108 = dma.hbm_to_vmem [thread:$0]  %s9, 2048, %s103, [#allocation11], 64, 64, 4
    $region41: #{neural_net_forward.1} parent=1 // pred_fallthru
      _
    // Predicated region
    $region42: #{neural_net_forward.1} parent=1 // pred_check
      _
    $region43: #{neural_net_forward.1} parent=1 // pred_check_branch
      %110 = sbr.rel (0) target = $region45
    $region44: #{neural_net_forward.1} parent=1 // pred_region
      %s112 = ssub.s32 16, 16
      %113 = vsyncadd [#allocation14], %s112
      %s115 = sshll.u32 [#allocation13], 4
      %s116 = int_to_ptr.vmem [resolvable:$true] %s115
      %118 = dma.hbm_to_vmem [thread:$0]  %s10, 16, %s116, [#allocation14]
    $region45: #{neural_net_forward.1} parent=1 // pred_fallthru
      _
    // Predicated region
    $region46: #{neural_net_forward.1} parent=1 // pred_check
      _
    $region47: #{neural_net_forward.1} parent=1 // pred_check_branch
      %120 = sbr.rel (0) target = $region49
    $region48: #{neural_net_forward.1} parent=1 // pred_region
      _
    $region49: #{neural_net_forward.1} parent=1 // pred_fallthru
      _
    // Predicated region
    $region50: #{neural_net_forward.1} parent=1 // pred_check
      _
    $region51: #{neural_net_forward.1} parent=1 // pred_check_branch
      %122 = sbr.rel (0) target = $region53
    $region52: #{neural_net_forward.1} parent=1 // pred_region
      _
    $region53: #{neural_net_forward.1} parent=1 // pred_fallthru
      _
    // Predicated region
    $region54: #{neural_net_forward.1} parent=1 // pred_check
      _
    $region55: #{neural_net_forward.1} parent=1 // pred_check_branch
      %124 = sbr.rel (0) target = $region57
    $region56: #{neural_net_forward.1} parent=1 // pred_region
      %125 = dma.done [#allocation3], 1024
    $region57: #{neural_net_forward.1} parent=1 // pred_fallthru
      _
    // Predicated region
    $region58: #{neural_net_forward.1} parent=1 // pred_check
      _
    $region59: #{neural_net_forward.1} parent=1 // pred_check_branch
      %127 = sbr.rel (0) target = $region61
    $region60: #{neural_net_forward.1} parent=1 // pred_region
      %128 = dma.done [#allocation5], 2048
    $region61: #{neural_net_forward.1} parent=1 // pred_fallthru
      _
    // Predicated region
    $region62: #{neural_net_forward.1} parent=1 // pred_check
      _
    $region63: #{neural_net_forward.1} parent=1 // pred_check_branch
      %130 = sbr.rel (0) target = $region65
    $region64: #{neural_net_forward.1} parent=1 // pred_region
      %131 = dma.done [#allocation5], 4096
    $region65: #{neural_net_forward.1} parent=1 // pred_fallthru
      _
    // Predicated region
    $region66: #{neural_net_forward.1} parent=1 // pred_check
      _
    $region67: #{neural_net_forward.1} parent=1 // pred_check_branch
      %133 = sbr.rel (0) target = $region69
    $region68: #{neural_net_forward.1} parent=1 // pred_region
      %134 = dma.done [#allocation8], 32
    $region69: #{neural_net_forward.1} parent=1 // pred_fallthru
      _
    // Predicated region
    $region70: #{neural_net_forward.1} parent=1 // pred_check
      _
    $region71: #{neural_net_forward.1} parent=1 // pred_check_branch
      %136 = sbr.rel (0) target = $region73
    $region72: #{neural_net_forward.1} parent=1 // pred_region
      %137 = dma.done [#allocation8], 4096
    $region73: #{neural_net_forward.1} parent=1 // pred_fallthru
      _
    // Predicated region
    $region74: #{neural_net_forward.1} parent=1 // pred_check
      _
    $region75: #{neural_net_forward.1} parent=1 // pred_check_branch
      %139 = sbr.rel (0) target = $region77
    $region76: #{neural_net_forward.1} parent=1 // pred_region
      %140 = dma.done [#allocation11], 32
    $region77: #{neural_net_forward.1} parent=1 // pred_fallthru
      _
    // Predicated region
    $region78: #{neural_net_forward.1} parent=1 // pred_check
      _
    $region79: #{neural_net_forward.1} parent=1 // pred_check_branch
      %142 = sbr.rel (0) target = $region81
    $region80: #{neural_net_forward.1} parent=1 // pred_region
      %143 = dma.done [#allocation11], 2048
    $region81: #{neural_net_forward.1} parent=1 // pred_fallthru
      _
    // Predicated region
    $region82: #{neural_net_forward.1} parent=1 // pred_check
      _
    $region83: #{neural_net_forward.1} parent=1 // pred_check_branch
      %145 = sbr.rel (0) target = $region85
    $region84: #{neural_net_forward.1} parent=1 // pred_region
      %146 = dma.done [#allocation14], 16
    $region85: #{neural_net_forward.1} parent=1 // pred_fallthru
      _
    %v148 = vld [vmem:[%s0] sm:$0xf]
    %v149 = vld [vmem:[#allocation2] sm:$0xf]
    %v150 = vld [vmem:[#allocation2 + $0x4] sm:$0xf]
    %v151 = vld [vmem:[#allocation2 + $0x8] sm:$0xf]
    %v152 = vld [vmem:[#allocation2 + $0xc] sm:$0xf]
    %v153 = vld [vmem:[#allocation2 + $0x10] sm:$0xf]
    %v154 = vld [vmem:[#allocation2 + $0x14] sm:$0xf]
    %v155 = vld [vmem:[#allocation2 + $0x18] sm:$0xf]
    %v156 = vld [vmem:[#allocation2 + $0x1c] sm:$0xf]
    %v157 = vld [vmem:[#allocation2 + $0x20] sm:$0xf]
    %v158 = vld [vmem:[#allocation2 + $0x24] sm:$0xf]
    %v159 = vld [vmem:[#allocation2 + $0x28] sm:$0xf]
    %v160 = vld [vmem:[#allocation2 + $0x2c] sm:$0xf]
    %v161 = vld [vmem:[#allocation2 + $0x30] sm:$0xf]
    %v162 = vld [vmem:[#allocation2 + $0x34] sm:$0xf]
    %v163 = vld [vmem:[#allocation2 + $0x38] sm:$0xf]
    %v164 = vld [vmem:[#allocation2 + $0x3c] sm:$0xf]
    %v165 = vld [vmem:[%s2] sm:$0x1]
    %v167 = vlaneseq
    %v168 = vshrl.u32 %v167, 7
    %v169 = vsub.s32 0, %v168
    %v170 = vrot.slane %v165, %v169
    %v188 = vunpack.c.l.b16 %v149
    %v189 = vunpack.c.l.b16 %v150
    %v190 = vunpack.c.l.b16 %v151
    %v191 = vunpack.c.l.b16 %v152
    %v192 = vunpack.c.l.b16 %v153
    %v193 = vunpack.c.l.b16 %v154
    %v194 = vunpack.c.l.b16 %v155
    %v195 = vunpack.c.l.b16 %v156
    %v196 = vunpack.c.l.b16 %v157
    %v197 = vunpack.c.l.b16 %v158
    %v198 = vunpack.c.l.b16 %v159
    %v199 = vunpack.c.l.b16 %v160
    %v200 = vunpack.c.l.b16 %v161
    %v201 = vunpack.c.l.b16 %v162
    %v202 = vunpack.c.l.b16 %v163
    %v203 = vunpack.c.l.b16 %v164
    %v204 = vpack.c.b16 %v189, %v188
    %v205 = vpack.c.b16 %v191, %v190
    %v206 = vpack.c.b16 %v193, %v192
    %v207 = vpack.c.b16 %v195, %v194
    %v208 = vpack.c.b16 %v197, %v196
    %v209 = vpack.c.b16 %v199, %v198
    %v210 = vpack.c.b16 %v201, %v200
    %v211 = vpack.c.b16 %v203, %v202
    %220 = vmatprep.subr.bf16.mxu0 0
    %221 = vmatpush1.bf16.msra.mxu0 %v204
    %222 = vmatprep.subr.bf16.mxu0 0
    %223 = vmatpush1.bf16.msra.mxu0 %v205
    %224 = vmatprep.subr.bf16.mxu0 0
    %225 = vmatpush1.bf16.msra.mxu0 %v206
    %226 = vmatprep.subr.bf16.mxu0 0
    %227 = vmatpush1.bf16.msra.mxu0 %v207
    %228 = vmatprep.subr.bf16.mxu0 0
    %229 = vmatpush1.bf16.msra.mxu0 %v208
    %230 = vmatprep.subr.bf16.mxu0 0
    %231 = vmatpush1.bf16.msra.mxu0 %v209
    %232 = vmatprep.subr.bf16.mxu0 0
    %233 = vmatpush1.bf16.msra.mxu0 %v210
    %234 = vmatprep.subr.bf16.mxu0 0
    %235 = vmatpush1.bf16.msra.mxu0 %v211
    %236 = vmatprep.subr.bf16.mxu0 0
    %237 = vmatpush1.bf16.msra.mxu0 0
    %238 = vmatprep.subr.bf16.mxu0 0
    %239 = vmatpush1.bf16.msra.mxu0 0
    %240 = vmatprep.subr.bf16.mxu0 0
    %241 = vmatpush1.bf16.msra.mxu0 0
    %242 = vmatprep.subr.bf16.mxu0 0
    %243 = vmatpush1.bf16.msra.mxu0 0
    %244 = vmatprep.subr.bf16.mxu0 0
    %245 = vmatpush1.bf16.msra.mxu0 0
    %246 = vmatprep.subr.bf16.mxu0 0
    %247 = vmatpush1.bf16.msra.mxu0 0
    %248 = vmatprep.subr.bf16.mxu0 0
    %249 = vmatpush1.bf16.msra.mxu0 0
    %250 = vmatprep.subr.bf16.mxu0 0
    %251 = vmatpush1.bf16.msra.mxu0 0
    %252 = vmatprep.mubr.bf16.mxu0 0
    %253 = vmatmul.mubr.bf16.gmra.mrb[0].mxu0 %v148
    %v254 = vpop.f32.mrb[0].mxu0
    %v255 = vadd.f32 %v170, %v254
    %v256 = vpop.f32.mrb[0].mxu0
    %v257 = vpop.f32.mrb[0].mxu0
    %v258 = vpop.f32.mrb[0].mxu0
    %259 = vdwg.mxu0
    %v260 = vmax.f32 %v255, 0.0
    %v261 = vpack.c.bf16 %v260, %v260
    %v262 = vld [vmem:[#allocation4] sm:$0xff]
    %v263 = vld [vmem:[#allocation4 + $0x8] sm:$0xff]
    %v264 = vld [vmem:[#allocation4 + $0x10] sm:$0xff]
    %v265 = vld [vmem:[#allocation4 + $0x18] sm:$0xff]
    %v266 = vld [vmem:[#allocation4 + $0x20] sm:$0xff]
    %v267 = vld [vmem:[#allocation4 + $0x28] sm:$0xff]
    %v268 = vld [vmem:[#allocation4 + $0x30] sm:$0xff]
    %v269 = vld [vmem:[#allocation4 + $0x38] sm:$0xff]
    %v270 = vld [vmem:[#allocation4 + $0x40] sm:$0xff]
    %v271 = vld [vmem:[#allocation4 + $0x48] sm:$0xff]
    %v272 = vld [vmem:[#allocation4 + $0x50] sm:$0xff]
    %v273 = vld [vmem:[#allocation4 + $0x58] sm:$0xff]
    %v274 = vld [vmem:[#allocation4 + $0x60] sm:$0xff]
    %v275 = vld [vmem:[#allocation4 + $0x68] sm:$0xff]
    %v276 = vld [vmem:[#allocation4 + $0x70] sm:$0xff]
    %v277 = vld [vmem:[#allocation4 + $0x78] sm:$0xff]
    %v278 = vld [vmem:[%s4] sm:$0x3]
    %v280 = vlaneseq
    %v281 = vshrl.u32 %v280, 7
    %v282 = vsub.s32 0, %v281
    %v283 = vrot.slane %v278, %v282
    %v284 = vlaneseq
    %v285 = vshrl.u32 %v284, 7
    %v286 = vsub.s32 1, %v285
    %v287 = vrot.slane %v278, %v286
    %v306 = vunpack.c.l.b16 %v262
    %v307 = vunpack.c.h.b16 %v262
    %v308 = vunpack.c.l.b16 %v263
    %v309 = vunpack.c.h.b16 %v263
    %v310 = vunpack.c.l.b16 %v264
    %v311 = vunpack.c.h.b16 %v264
    %v312 = vunpack.c.l.b16 %v265
    %v313 = vunpack.c.h.b16 %v265
    %v314 = vunpack.c.l.b16 %v266
    %v315 = vunpack.c.h.b16 %v266
    %v316 = vunpack.c.l.b16 %v267
    %v317 = vunpack.c.h.b16 %v267
    %v318 = vunpack.c.l.b16 %v268
    %v319 = vunpack.c.h.b16 %v268
    %v320 = vunpack.c.l.b16 %v269
    %v321 = vunpack.c.h.b16 %v269
    %v322 = vunpack.c.l.b16 %v270
    %v323 = vunpack.c.h.b16 %v270
    %v324 = vunpack.c.l.b16 %v271
    %v325 = vunpack.c.h.b16 %v271
    %v326 = vunpack.c.l.b16 %v272
    %v327 = vunpack.c.h.b16 %v272
    %v328 = vunpack.c.l.b16 %v273
    %v329 = vunpack.c.h.b16 %v273
    %v330 = vunpack.c.l.b16 %v274
    %v331 = vunpack.c.h.b16 %v274
    %v332 = vunpack.c.l.b16 %v275
    %v333 = vunpack.c.h.b16 %v275
    %v334 = vunpack.c.l.b16 %v276
    %v335 = vunpack.c.h.b16 %v276
    %v336 = vunpack.c.l.b16 %v277
    %v337 = vunpack.c.h.b16 %v277
    %v338 = vpack.c.b16 %v308, %v306
    %v339 = vpack.c.b16 %v309, %v307
    %v340 = vpack.c.b16 %v312, %v310
    %v341 = vpack.c.b16 %v313, %v311
    %v342 = vpack.c.b16 %v316, %v314
    %v343 = vpack.c.b16 %v317, %v315
    %v344 = vpack.c.b16 %v320, %v318
    %v345 = vpack.c.b16 %v321, %v319
    %v346 = vpack.c.b16 %v324, %v322
    %v347 = vpack.c.b16 %v325, %v323
    %v348 = vpack.c.b16 %v328, %v326
    %v349 = vpack.c.b16 %v329, %v327
    %v350 = vpack.c.b16 %v332, %v330
    %v351 = vpack.c.b16 %v333, %v331
    %v352 = vpack.c.b16 %v336, %v334
    %v353 = vpack.c.b16 %v337, %v335
    %370 = vmatprep.subr.bf16.mxu0 %v339
    %371 = vmatpush1.bf16.msra.mxu0 %v338
    %372 = vmatprep.subr.bf16.mxu0 %v341
    %373 = vmatpush1.bf16.msra.mxu0 %v340
    %374 = vmatprep.subr.bf16.mxu0 %v343
    %375 = vmatpush1.bf16.msra.mxu0 %v342
    %376 = vmatprep.subr.bf16.mxu0 %v345
    %377 = vmatpush1.bf16.msra.mxu0 %v344
    %378 = vmatprep.subr.bf16.mxu0 %v347
    %379 = vmatpush1.bf16.msra.mxu0 %v346
    %380 = vmatprep.subr.bf16.mxu0 %v349
    %381 = vmatpush1.bf16.msra.mxu0 %v348
    %382 = vmatprep.subr.bf16.mxu0 %v351
    %383 = vmatpush1.bf16.msra.mxu0 %v350
    %384 = vmatprep.subr.bf16.mxu0 %v353
    %385 = vmatpush1.bf16.msra.mxu0 %v352
    %386 = vmatprep.subr.bf16.mxu0 0
    %387 = vmatpush1.bf16.msra.mxu0 0
    %388 = vmatprep.subr.bf16.mxu0 0
    %389 = vmatpush1.bf16.msra.mxu0 0
    %390 = vmatprep.subr.bf16.mxu0 0
    %391 = vmatpush1.bf16.msra.mxu0 0
    %392 = vmatprep.subr.bf16.mxu0 0
    %393 = vmatpush1.bf16.msra.mxu0 0
    %394 = vmatprep.subr.bf16.mxu0 0
    %395 = vmatpush1.bf16.msra.mxu0 0
    %396 = vmatprep.subr.bf16.mxu0 0
    %397 = vmatpush1.bf16.msra.mxu0 0
    %398 = vmatprep.subr.bf16.mxu0 0
    %399 = vmatpush1.bf16.msra.mxu0 0
    %400 = vmatprep.subr.bf16.mxu0 0
    %401 = vmatpush1.bf16.msra.mxu0 0
    %402 = vmatprep.mubr.bf16.mxu0 0
    %403 = vmatmul.mubr.bf16.gmra.mrb[0].mxu0 %v261
    %v404 = vpop.f32.mrb[0].mxu0
    %v405 = vadd.f32 %v283, %v404
    %v406 = vpop.f32.mrb[0].mxu0
    %v407 = vadd.f32 %v287, %v406
    %v408 = vpop.f32.mrb[0].mxu0
    %v409 = vpop.f32.mrb[0].mxu0
    %410 = vdwg.mxu0
    %v411 = vmax.f32 %v405, 0.0
    %v412 = vmax.f32 %v407, 0.0
    %v413 = vpack.c.bf16 %v411, %v411
    %v414 = vpack.c.bf16 %v412, %v412
    %v415 = vld [vmem:[#allocation6] sm:$0xff]
    %v416 = vld [vmem:[#allocation6 + $0x8] sm:$0xff]
    %v417 = vld [vmem:[#allocation6 + $0x10] sm:$0xff]
    %v418 = vld [vmem:[#allocation6 + $0x18] sm:$0xff]
    %v419 = vld [vmem:[#allocation6 + $0x20] sm:$0xff]
    %v420 = vld [vmem:[#allocation6 + $0x28] sm:$0xff]
    %v421 = vld [vmem:[#allocation6 + $0x30] sm:$0xff]
    %v422 = vld [vmem:[#allocation6 + $0x38] sm:$0xff]
    %v423 = vld [vmem:[#allocation6 + $0x40] sm:$0xff]
    %v424 = vld [vmem:[#allocation6 + $0x48] sm:$0xff]
    %v425 = vld [vmem:[#allocation6 + $0x50] sm:$0xff]
    %v426 = vld [vmem:[#allocation6 + $0x58] sm:$0xff]
    %v427 = vld [vmem:[#allocation6 + $0x60] sm:$0xff]
    %v428 = vld [vmem:[#allocation6 + $0x68] sm:$0xff]
    %v429 = vld [vmem:[#allocation6 + $0x70] sm:$0xff]
    %v430 = vld [vmem:[#allocation6 + $0x78] sm:$0xff]
    %v431 = vld [vmem:[#allocation6 + $0x80] sm:$0xff]
    %v432 = vld [vmem:[#allocation6 + $0x88] sm:$0xff]
    %v433 = vld [vmem:[#allocation6 + $0x90] sm:$0xff]
    %v434 = vld [vmem:[#allocation6 + $0x98] sm:$0xff]
    %v435 = vld [vmem:[#allocation6 + $0xa0] sm:$0xff]
    %v436 = vld [vmem:[#allocation6 + $0xa8] sm:$0xff]
    %v437 = vld [vmem:[#allocation6 + $0xb0] sm:$0xff]
    %v438 = vld [vmem:[#allocation6 + $0xb8] sm:$0xff]
    %v439 = vld [vmem:[#allocation6 + $0xc0] sm:$0xff]
    %v440 = vld [vmem:[#allocation6 + $0xc8] sm:$0xff]
    %v441 = vld [vmem:[#allocation6 + $0xd0] sm:$0xff]
    %v442 = vld [vmem:[#allocation6 + $0xd8] sm:$0xff]
    %v443 = vld [vmem:[#allocation6 + $0xe0] sm:$0xff]
    %v444 = vld [vmem:[#allocation6 + $0xe8] sm:$0xff]
    %v445 = vld [vmem:[#allocation6 + $0xf0] sm:$0xff]
    %v446 = vld [vmem:[#allocation6 + $0xf8] sm:$0xff]
    %v447 = vld [vmem:[#allocation7] sm:$0x3]
    %v449 = vlaneseq
    %v450 = vshrl.u32 %v449, 7
    %v451 = vsub.s32 0, %v450
    %v452 = vrot.slane %v447, %v451
    %v453 = vlaneseq
    %v454 = vshrl.u32 %v453, 7
    %v455 = vsub.s32 1, %v454
    %v456 = vrot.slane %v447, %v455
    %v491 = vunpack.c.l.b16 %v415
    %v492 = vunpack.c.h.b16 %v415
    %v493 = vunpack.c.l.b16 %v416
    %v494 = vunpack.c.h.b16 %v416
    %v495 = vunpack.c.l.b16 %v417
    %v496 = vunpack.c.h.b16 %v417
    %v497 = vunpack.c.l.b16 %v418
    %v498 = vunpack.c.h.b16 %v418
    %v499 = vunpack.c.l.b16 %v419
    %v500 = vunpack.c.h.b16 %v419
    %v501 = vunpack.c.l.b16 %v420
    %v502 = vunpack.c.h.b16 %v420
    %v503 = vunpack.c.l.b16 %v421
    %v504 = vunpack.c.h.b16 %v421
    %v505 = vunpack.c.l.b16 %v422
    %v506 = vunpack.c.h.b16 %v422
    %v507 = vunpack.c.l.b16 %v423
    %v508 = vunpack.c.h.b16 %v423
    %v509 = vunpack.c.l.b16 %v424
    %v510 = vunpack.c.h.b16 %v424
    %v511 = vunpack.c.l.b16 %v425
    %v512 = vunpack.c.h.b16 %v425
    %v513 = vunpack.c.l.b16 %v426
    %v514 = vunpack.c.h.b16 %v426
    %v515 = vunpack.c.l.b16 %v427
    %v516 = vunpack.c.h.b16 %v427
    %v517 = vunpack.c.l.b16 %v428
    %v518 = vunpack.c.h.b16 %v428
    %v519 = vunpack.c.l.b16 %v429
    %v520 = vunpack.c.h.b16 %v429
    %v521 = vunpack.c.l.b16 %v430
    %v522 = vunpack.c.h.b16 %v430
    %v523 = vunpack.c.l.b16 %v431
    %v524 = vunpack.c.h.b16 %v431
    %v525 = vunpack.c.l.b16 %v432
    %v526 = vunpack.c.h.b16 %v432
    %v527 = vunpack.c.l.b16 %v433
    %v528 = vunpack.c.h.b16 %v433
    %v529 = vunpack.c.l.b16 %v434
    %v530 = vunpack.c.h.b16 %v434
    %v531 = vunpack.c.l.b16 %v435
    %v532 = vunpack.c.h.b16 %v435
    %v533 = vunpack.c.l.b16 %v436
    %v534 = vunpack.c.h.b16 %v436
    %v535 = vunpack.c.l.b16 %v437
    %v536 = vunpack.c.h.b16 %v437
    %v537 = vunpack.c.l.b16 %v438
    %v538 = vunpack.c.h.b16 %v438
    %v539 = vunpack.c.l.b16 %v439
    %v540 = vunpack.c.h.b16 %v439
    %v541 = vunpack.c.l.b16 %v440
    %v542 = vunpack.c.h.b16 %v440
    %v543 = vunpack.c.l.b16 %v441
    %v544 = vunpack.c.h.b16 %v441
    %v545 = vunpack.c.l.b16 %v442
    %v546 = vunpack.c.h.b16 %v442
    %v547 = vunpack.c.l.b16 %v443
    %v548 = vunpack.c.h.b16 %v443
    %v549 = vunpack.c.l.b16 %v444
    %v550 = vunpack.c.h.b16 %v444
    %v551 = vunpack.c.l.b16 %v445
    %v552 = vunpack.c.h.b16 %v445
    %v553 = vunpack.c.l.b16 %v446
    %v554 = vunpack.c.h.b16 %v446
    %v555 = vpack.c.b16 %v493, %v491
    %v556 = vpack.c.b16 %v494, %v492
    %v557 = vpack.c.b16 %v497, %v495
    %v558 = vpack.c.b16 %v498, %v496
    %v559 = vpack.c.b16 %v501, %v499
    %v560 = vpack.c.b16 %v502, %v500
    %v561 = vpack.c.b16 %v505, %v503
    %v562 = vpack.c.b16 %v506, %v504
    %v563 = vpack.c.b16 %v509, %v507
    %v564 = vpack.c.b16 %v510, %v508
    %v565 = vpack.c.b16 %v513, %v511
    %v566 = vpack.c.b16 %v514, %v512
    %v567 = vpack.c.b16 %v517, %v515
    %v568 = vpack.c.b16 %v518, %v516
    %v569 = vpack.c.b16 %v521, %v519
    %v570 = vpack.c.b16 %v522, %v520
    %v571 = vpack.c.b16 %v525, %v523
    %v572 = vpack.c.b16 %v526, %v524
    %v573 = vpack.c.b16 %v529, %v527
    %v574 = vpack.c.b16 %v530, %v528
    %v575 = vpack.c.b16 %v533, %v531
    %v576 = vpack.c.b16 %v534, %v532
    %v577 = vpack.c.b16 %v537, %v535
    %v578 = vpack.c.b16 %v538, %v536
    %v579 = vpack.c.b16 %v541, %v539
    %v580 = vpack.c.b16 %v542, %v540
    %v581 = vpack.c.b16 %v545, %v543
    %v582 = vpack.c.b16 %v546, %v544
    %v583 = vpack.c.b16 %v549, %v547
    %v584 = vpack.c.b16 %v550, %v548
    %v585 = vpack.c.b16 %v553, %v551
    %v586 = vpack.c.b16 %v554, %v552
    %619 = vmatprep.subr.bf16.mxu0 %v556
    %620 = vmatpush1.bf16.msra.mxu0 %v555
    %621 = vmatprep.subr.bf16.mxu0 %v558
    %622 = vmatpush1.bf16.msra.mxu0 %v557
    %623 = vmatprep.subr.bf16.mxu0 %v560
    %624 = vmatpush1.bf16.msra.mxu0 %v559
    %625 = vmatprep.subr.bf16.mxu0 %v562
    %626 = vmatpush1.bf16.msra.mxu0 %v561
    %627 = vmatprep.subr.bf16.mxu0 %v564
    %628 = vmatpush1.bf16.msra.mxu0 %v563
    %629 = vmatprep.subr.bf16.mxu0 %v566
    %630 = vmatpush1.bf16.msra.mxu0 %v565
    %631 = vmatprep.subr.bf16.mxu0 %v568
    %632 = vmatpush1.bf16.msra.mxu0 %v567
    %633 = vmatprep.subr.bf16.mxu0 %v570
    %634 = vmatpush1.bf16.msra.mxu0 %v569
    %635 = vmatprep.subr.bf16.mxu0 %v572
    %636 = vmatpush1.bf16.msra.mxu0 %v571
    %637 = vmatprep.subr.bf16.mxu0 %v574
    %638 = vmatpush1.bf16.msra.mxu0 %v573
    %639 = vmatprep.subr.bf16.mxu0 %v576
    %640 = vmatpush1.bf16.msra.mxu0 %v575
    %641 = vmatprep.subr.bf16.mxu0 %v578
    %642 = vmatpush1.bf16.msra.mxu0 %v577
    %643 = vmatprep.subr.bf16.mxu0 %v580
    %644 = vmatpush1.bf16.msra.mxu0 %v579
    %645 = vmatprep.subr.bf16.mxu0 %v582
    %646 = vmatpush1.bf16.msra.mxu0 %v581
    %647 = vmatprep.subr.bf16.mxu0 %v584
    %648 = vmatpush1.bf16.msra.mxu0 %v583
    %649 = vmatprep.subr.bf16.mxu0 %v586
    %650 = vmatpush1.bf16.msra.mxu0 %v585
    %651 = vmatprep.mubr.bf16.mxu0 %v414
    %652 = vmatmul.mubr.bf16.gmra.mrb[0].mxu0 %v413
    %v653 = vpop.f32.mrb[0].mxu0
    %v654 = vadd.f32 %v452, %v653
    %v655 = vpop.f32.mrb[0].mxu0
    %v656 = vadd.f32 %v456, %v655
    %v657 = vpop.f32.mrb[0].mxu0
    %v658 = vpop.f32.mrb[0].mxu0
    %659 = vdwg.mxu0
    %v660 = vmax.f32 %v654, 0.0
    %v661 = vmax.f32 %v656, 0.0
    %v662 = vpack.c.bf16 %v660, %v660
    %v663 = vpack.c.bf16 %v661, %v661
    %v664 = vld [vmem:[#allocation9] sm:$0xff]
    %v665 = vld [vmem:[#allocation9 + $0x8] sm:$0xff]
    %v666 = vld [vmem:[#allocation9 + $0x10] sm:$0xff]
    %v667 = vld [vmem:[#allocation9 + $0x18] sm:$0xff]
    %v668 = vld [vmem:[#allocation9 + $0x20] sm:$0xff]
    %v669 = vld [vmem:[#allocation9 + $0x28] sm:$0xff]
    %v670 = vld [vmem:[#allocation9 + $0x30] sm:$0xff]
    %v671 = vld [vmem:[#allocation9 + $0x38] sm:$0xff]
    %v672 = vld [vmem:[#allocation9 + $0x40] sm:$0xff]
    %v673 = vld [vmem:[#allocation9 + $0x48] sm:$0xff]
    %v674 = vld [vmem:[#allocation9 + $0x50] sm:$0xff]
    %v675 = vld [vmem:[#allocation9 + $0x58] sm:$0xff]
    %v676 = vld [vmem:[#allocation9 + $0x60] sm:$0xff]
    %v677 = vld [vmem:[#allocation9 + $0x68] sm:$0xff]
    %v678 = vld [vmem:[#allocation9 + $0x70] sm:$0xff]
    %v679 = vld [vmem:[#allocation9 + $0x78] sm:$0xff]
    %v680 = vld [vmem:[#allocation9 + $0x80] sm:$0xff]
    %v681 = vld [vmem:[#allocation9 + $0x88] sm:$0xff]
    %v682 = vld [vmem:[#allocation9 + $0x90] sm:$0xff]
    %v683 = vld [vmem:[#allocation9 + $0x98] sm:$0xff]
    %v684 = vld [vmem:[#allocation9 + $0xa0] sm:$0xff]
    %v685 = vld [vmem:[#allocation9 + $0xa8] sm:$0xff]
    %v686 = vld [vmem:[#allocation9 + $0xb0] sm:$0xff]
    %v687 = vld [vmem:[#allocation9 + $0xb8] sm:$0xff]
    %v688 = vld [vmem:[#allocation9 + $0xc0] sm:$0xff]
    %v689 = vld [vmem:[#allocation9 + $0xc8] sm:$0xff]
    %v690 = vld [vmem:[#allocation9 + $0xd0] sm:$0xff]
    %v691 = vld [vmem:[#allocation9 + $0xd8] sm:$0xff]
    %v692 = vld [vmem:[#allocation9 + $0xe0] sm:$0xff]
    %v693 = vld [vmem:[#allocation9 + $0xe8] sm:$0xff]
    %v694 = vld [vmem:[#allocation9 + $0xf0] sm:$0xff]
    %v695 = vld [vmem:[#allocation9 + $0xf8] sm:$0xff]
    %v696 = vld [vmem:[#allocation10] sm:$0x3]
    %v698 = vlaneseq
    %v699 = vshrl.u32 %v698, 7
    %v700 = vsub.s32 0, %v699
    %v701 = vrot.slane %v696, %v700
    %v702 = vlaneseq
    %v703 = vshrl.u32 %v702, 7
    %v704 = vsub.s32 1, %v703
    %v705 = vrot.slane %v696, %v704
    %v740 = vunpack.c.l.b16 %v664
    %v741 = vunpack.c.h.b16 %v664
    %v742 = vunpack.c.l.b16 %v665
    %v743 = vunpack.c.h.b16 %v665
    %v744 = vunpack.c.l.b16 %v666
    %v745 = vunpack.c.h.b16 %v666
    %v746 = vunpack.c.l.b16 %v667
    %v747 = vunpack.c.h.b16 %v667
    %v748 = vunpack.c.l.b16 %v668
    %v749 = vunpack.c.h.b16 %v668
    %v750 = vunpack.c.l.b16 %v669
    %v751 = vunpack.c.h.b16 %v669
    %v752 = vunpack.c.l.b16 %v670
    %v753 = vunpack.c.h.b16 %v670
    %v754 = vunpack.c.l.b16 %v671
    %v755 = vunpack.c.h.b16 %v671
    %v756 = vunpack.c.l.b16 %v672
    %v757 = vunpack.c.h.b16 %v672
    %v758 = vunpack.c.l.b16 %v673
    %v759 = vunpack.c.h.b16 %v673
    %v760 = vunpack.c.l.b16 %v674
    %v761 = vunpack.c.h.b16 %v674
    %v762 = vunpack.c.l.b16 %v675
    %v763 = vunpack.c.h.b16 %v675
    %v764 = vunpack.c.l.b16 %v676
    %v765 = vunpack.c.h.b16 %v676
    %v766 = vunpack.c.l.b16 %v677
    %v767 = vunpack.c.h.b16 %v677
    %v768 = vunpack.c.l.b16 %v678
    %v769 = vunpack.c.h.b16 %v678
    %v770 = vunpack.c.l.b16 %v679
    %v771 = vunpack.c.h.b16 %v679
    %v772 = vunpack.c.l.b16 %v680
    %v773 = vunpack.c.h.b16 %v680
    %v774 = vunpack.c.l.b16 %v681
    %v775 = vunpack.c.h.b16 %v681
    %v776 = vunpack.c.l.b16 %v682
    %v777 = vunpack.c.h.b16 %v682
    %v778 = vunpack.c.l.b16 %v683
    %v779 = vunpack.c.h.b16 %v683
    %v780 = vunpack.c.l.b16 %v684
    %v781 = vunpack.c.h.b16 %v684
    %v782 = vunpack.c.l.b16 %v685
    %v783 = vunpack.c.h.b16 %v685
    %v784 = vunpack.c.l.b16 %v686
    %v785 = vunpack.c.h.b16 %v686
    %v786 = vunpack.c.l.b16 %v687
    %v787 = vunpack.c.h.b16 %v687
    %v788 = vunpack.c.l.b16 %v688
    %v789 = vunpack.c.h.b16 %v688
    %v790 = vunpack.c.l.b16 %v689
    %v791 = vunpack.c.h.b16 %v689
    %v792 = vunpack.c.l.b16 %v690
    %v793 = vunpack.c.h.b16 %v690
    %v794 = vunpack.c.l.b16 %v691
    %v795 = vunpack.c.h.b16 %v691
    %v796 = vunpack.c.l.b16 %v692
    %v797 = vunpack.c.h.b16 %v692
    %v798 = vunpack.c.l.b16 %v693
    %v799 = vunpack.c.h.b16 %v693
    %v800 = vunpack.c.l.b16 %v694
    %v801 = vunpack.c.h.b16 %v694
    %v802 = vunpack.c.l.b16 %v695
    %v803 = vunpack.c.h.b16 %v695
    %v804 = vpack.c.b16 %v742, %v740
    %v805 = vpack.c.b16 %v743, %v741
    %v806 = vpack.c.b16 %v746, %v744
    %v807 = vpack.c.b16 %v747, %v745
    %v808 = vpack.c.b16 %v750, %v748
    %v809 = vpack.c.b16 %v751, %v749
    %v810 = vpack.c.b16 %v754, %v752
    %v811 = vpack.c.b16 %v755, %v753
    %v812 = vpack.c.b16 %v758, %v756
    %v813 = vpack.c.b16 %v759, %v757
    %v814 = vpack.c.b16 %v762, %v760
    %v815 = vpack.c.b16 %v763, %v761
    %v816 = vpack.c.b16 %v766, %v764
    %v817 = vpack.c.b16 %v767, %v765
    %v818 = vpack.c.b16 %v770, %v768
    %v819 = vpack.c.b16 %v771, %v769
    %v820 = vpack.c.b16 %v774, %v772
    %v821 = vpack.c.b16 %v775, %v773
    %v822 = vpack.c.b16 %v778, %v776
    %v823 = vpack.c.b16 %v779, %v777
    %v824 = vpack.c.b16 %v782, %v780
    %v825 = vpack.c.b16 %v783, %v781
    %v826 = vpack.c.b16 %v786, %v784
    %v827 = vpack.c.b16 %v787, %v785
    %v828 = vpack.c.b16 %v790, %v788
    %v829 = vpack.c.b16 %v791, %v789
    %v830 = vpack.c.b16 %v794, %v792
    %v831 = vpack.c.b16 %v795, %v793
    %v832 = vpack.c.b16 %v798, %v796
    %v833 = vpack.c.b16 %v799, %v797
    %v834 = vpack.c.b16 %v802, %v800
    %v835 = vpack.c.b16 %v803, %v801
    %868 = vmatprep.subr.bf16.mxu0 %v805
    %869 = vmatpush1.bf16.msra.mxu0 %v804
    %870 = vmatprep.subr.bf16.mxu0 %v807
    %871 = vmatpush1.bf16.msra.mxu0 %v806
    %872 = vmatprep.subr.bf16.mxu0 %v809
    %873 = vmatpush1.bf16.msra.mxu0 %v808
    %874 = vmatprep.subr.bf16.mxu0 %v811
    %875 = vmatpush1.bf16.msra.mxu0 %v810
    %876 = vmatprep.subr.bf16.mxu0 %v813
    %877 = vmatpush1.bf16.msra.mxu0 %v812
    %878 = vmatprep.subr.bf16.mxu0 %v815
    %879 = vmatpush1.bf16.msra.mxu0 %v814
    %880 = vmatprep.subr.bf16.mxu0 %v817
    %881 = vmatpush1.bf16.msra.mxu0 %v816
    %882 = vmatprep.subr.bf16.mxu0 %v819
    %883 = vmatpush1.bf16.msra.mxu0 %v818
    %884 = vmatprep.subr.bf16.mxu0 %v821
    %885 = vmatpush1.bf16.msra.mxu0 %v820
    %886 = vmatprep.subr.bf16.mxu0 %v823
    %887 = vmatpush1.bf16.msra.mxu0 %v822
    %888 = vmatprep.subr.bf16.mxu0 %v825
    %889 = vmatpush1.bf16.msra.mxu0 %v824
    %890 = vmatprep.subr.bf16.mxu0 %v827
    %891 = vmatpush1.bf16.msra.mxu0 %v826
    %892 = vmatprep.subr.bf16.mxu0 %v829
    %893 = vmatpush1.bf16.msra.mxu0 %v828
    %894 = vmatprep.subr.bf16.mxu0 %v831
    %895 = vmatpush1.bf16.msra.mxu0 %v830
    %896 = vmatprep.subr.bf16.mxu0 %v833
    %897 = vmatpush1.bf16.msra.mxu0 %v832
    %898 = vmatprep.subr.bf16.mxu0 %v835
    %899 = vmatpush1.bf16.msra.mxu0 %v834
    %900 = vmatprep.mubr.bf16.mxu0 %v663
    %901 = vmatmul.mubr.bf16.gmra.mrb[0].mxu0 %v662
    %v902 = vpop.f32.mrb[0].mxu0
    %v903 = vadd.f32 %v701, %v902
    %v904 = vpop.f32.mrb[0].mxu0
    %v905 = vadd.f32 %v705, %v904
    %v906 = vpop.f32.mrb[0].mxu0
    %v907 = vpop.f32.mrb[0].mxu0
    %908 = vdwg.mxu0
    %v909 = vmax.f32 %v903, 0.0
    %v910 = vmax.f32 %v905, 0.0
    %v911 = vpack.c.bf16 %v909, %v909
    %v912 = vpack.c.bf16 %v910, %v910
    %v913 = vld [vmem:[#allocation12] sm:$0xf]
    %v914 = vld [vmem:[#allocation12 + $0x4] sm:$0xf]
    %v915 = vld [vmem:[#allocation12 + $0x8] sm:$0xf]
    %v916 = vld [vmem:[#allocation12 + $0xc] sm:$0xf]
    %v917 = vld [vmem:[#allocation12 + $0x10] sm:$0xf]
    %v918 = vld [vmem:[#allocation12 + $0x14] sm:$0xf]
    %v919 = vld [vmem:[#allocation12 + $0x18] sm:$0xf]
    %v920 = vld [vmem:[#allocation12 + $0x1c] sm:$0xf]
    %v921 = vld [vmem:[#allocation12 + $0x20] sm:$0xf]
    %v922 = vld [vmem:[#allocation12 + $0x24] sm:$0xf]
    %v923 = vld [vmem:[#allocation12 + $0x28] sm:$0xf]
    %v924 = vld [vmem:[#allocation12 + $0x2c] sm:$0xf]
    %v925 = vld [vmem:[#allocation12 + $0x30] sm:$0xf]
    %v926 = vld [vmem:[#allocation12 + $0x34] sm:$0xf]
    %v927 = vld [vmem:[#allocation12 + $0x38] sm:$0xf]
    %v928 = vld [vmem:[#allocation12 + $0x3c] sm:$0xf]
    %v929 = vld [vmem:[#allocation12 + $0x40] sm:$0xf]
    %v930 = vld [vmem:[#allocation12 + $0x44] sm:$0xf]
    %v931 = vld [vmem:[#allocation12 + $0x48] sm:$0xf]
    %v932 = vld [vmem:[#allocation12 + $0x4c] sm:$0xf]
    %v933 = vld [vmem:[#allocation12 + $0x50] sm:$0xf]
    %v934 = vld [vmem:[#allocation12 + $0x54] sm:$0xf]
    %v935 = vld [vmem:[#allocation12 + $0x58] sm:$0xf]
    %v936 = vld [vmem:[#allocation12 + $0x5c] sm:$0xf]
    %v937 = vld [vmem:[#allocation12 + $0x60] sm:$0xf]
    %v938 = vld [vmem:[#allocation12 + $0x64] sm:$0xf]
    %v939 = vld [vmem:[#allocation12 + $0x68] sm:$0xf]
    %v940 = vld [vmem:[#allocation12 + $0x6c] sm:$0xf]
    %v941 = vld [vmem:[#allocation12 + $0x70] sm:$0xf]
    %v942 = vld [vmem:[#allocation12 + $0x74] sm:$0xf]
    %v943 = vld [vmem:[#allocation12 + $0x78] sm:$0xf]
    %v944 = vld [vmem:[#allocation12 + $0x7c] sm:$0xf]
    %v945 = vld [vmem:[#allocation13] sm:$0x1]
    %v947 = vlaneseq
    %v948 = vshrl.u32 %v947, 7
    %v949 = vsub.s32 0, %v948
    %v950 = vrot.slane %v945, %v949
    %v984 = vunpack.c.l.b16 %v913
    %v985 = vunpack.c.l.b16 %v914
    %v986 = vunpack.c.l.b16 %v915
    %v987 = vunpack.c.l.b16 %v916
    %v988 = vunpack.c.l.b16 %v917
    %v989 = vunpack.c.l.b16 %v918
    %v990 = vunpack.c.l.b16 %v919
    %v991 = vunpack.c.l.b16 %v920
    %v992 = vunpack.c.l.b16 %v921
    %v993 = vunpack.c.l.b16 %v922
    %v994 = vunpack.c.l.b16 %v923
    %v995 = vunpack.c.l.b16 %v924
    %v996 = vunpack.c.l.b16 %v925
    %v997 = vunpack.c.l.b16 %v926
    %v998 = vunpack.c.l.b16 %v927
    %v999 = vunpack.c.l.b16 %v928
    %v1000 = vunpack.c.l.b16 %v929
    %v1001 = vunpack.c.l.b16 %v930
    %v1002 = vunpack.c.l.b16 %v931
    %v1003 = vunpack.c.l.b16 %v932
    %v1004 = vunpack.c.l.b16 %v933
    %v1005 = vunpack.c.l.b16 %v934
    %v1006 = vunpack.c.l.b16 %v935
    %v1007 = vunpack.c.l.b16 %v936
    %v1008 = vunpack.c.l.b16 %v937
    %v1009 = vunpack.c.l.b16 %v938
    %v1010 = vunpack.c.l.b16 %v939
    %v1011 = vunpack.c.l.b16 %v940
    %v1012 = vunpack.c.l.b16 %v941
    %v1013 = vunpack.c.l.b16 %v942
    %v1014 = vunpack.c.l.b16 %v943
    %v1015 = vunpack.c.l.b16 %v944
    %v1016 = vpack.c.b16 %v985, %v984
    %v1017 = vpack.c.b16 %v987, %v986
    %v1018 = vpack.c.b16 %v989, %v988
    %v1019 = vpack.c.b16 %v991, %v990
    %v1020 = vpack.c.b16 %v993, %v992
    %v1021 = vpack.c.b16 %v995, %v994
    %v1022 = vpack.c.b16 %v997, %v996
    %v1023 = vpack.c.b16 %v999, %v998
    %v1024 = vpack.c.b16 %v1001, %v1000
    %v1025 = vpack.c.b16 %v1003, %v1002
    %v1026 = vpack.c.b16 %v1005, %v1004
    %v1027 = vpack.c.b16 %v1007, %v1006
    %v1028 = vpack.c.b16 %v1009, %v1008
    %v1029 = vpack.c.b16 %v1011, %v1010
    %v1030 = vpack.c.b16 %v1013, %v1012
    %v1031 = vpack.c.b16 %v1015, %v1014
    %1048 = vmatprep.subr.bf16.mxu0 0
    %1049 = vmatpush1.bf16.msra.mxu0 %v1016
    %1050 = vmatprep.subr.bf16.mxu0 0
    %1051 = vmatpush1.bf16.msra.mxu0 %v1017
    %1052 = vmatprep.subr.bf16.mxu0 0
    %1053 = vmatpush1.bf16.msra.mxu0 %v1018
    %1054 = vmatprep.subr.bf16.mxu0 0
    %1055 = vmatpush1.bf16.msra.mxu0 %v1019
    %1056 = vmatprep.subr.bf16.mxu0 0
    %1057 = vmatpush1.bf16.msra.mxu0 %v1020
    %1058 = vmatprep.subr.bf16.mxu0 0
    %1059 = vmatpush1.bf16.msra.mxu0 %v1021
    %1060 = vmatprep.subr.bf16.mxu0 0
    %1061 = vmatpush1.bf16.msra.mxu0 %v1022
    %1062 = vmatprep.subr.bf16.mxu0 0
    %1063 = vmatpush1.bf16.msra.mxu0 %v1023
    %1064 = vmatprep.subr.bf16.mxu0 0
    %1065 = vmatpush1.bf16.msra.mxu0 %v1024
    %1066 = vmatprep.subr.bf16.mxu0 0
    %1067 = vmatpush1.bf16.msra.mxu0 %v1025
    %1068 = vmatprep.subr.bf16.mxu0 0
    %1069 = vmatpush1.bf16.msra.mxu0 %v1026
    %1070 = vmatprep.subr.bf16.mxu0 0
    %1071 = vmatpush1.bf16.msra.mxu0 %v1027
    %1072 = vmatprep.subr.bf16.mxu0 0
    %1073 = vmatpush1.bf16.msra.mxu0 %v1028
    %1074 = vmatprep.subr.bf16.mxu0 0
    %1075 = vmatpush1.bf16.msra.mxu0 %v1029
    %1076 = vmatprep.subr.bf16.mxu0 0
    %1077 = vmatpush1.bf16.msra.mxu0 %v1030
    %1078 = vmatprep.subr.bf16.mxu0 0
    %1079 = vmatpush1.bf16.msra.mxu0 %v1031
    %1080 = vmatprep.mubr.bf16.mxu0 %v912
    %1081 = vmatmul.mubr.bf16.gmra.mrb[0].mxu0 %v911
    %v1082 = vpop.f32.mrb[0].mxu0
    %v1083 = vadd.f32 %v950, %v1082
    %v1084 = vpop.f32.mrb[0].mxu0
    %v1085 = vpop.f32.mrb[0].mxu0
    %v1086 = vpop.f32.mrb[0].mxu0
    %1087 = vdwg.mxu0
    %v1088 = vmax.f32 %v1083, 0.0
    %v1089 = vpack.c.bf16 %v1088, %v1088
    %v1090 = vld [vmem:[%s11] sm:$0xf]
    %v1091 = vld [vmem:[%s11 + $0x4] sm:$0xf]
    %v1092 = vld [vmem:[%s11 + $0x8] sm:$0xf]
    %v1093 = vld [vmem:[%s11 + $0xc] sm:$0xf]
    %v1094 = vld [vmem:[%s11 + $0x10] sm:$0xf]
    %v1095 = vld [vmem:[%s11 + $0x14] sm:$0xf]
    %v1096 = vld [vmem:[%s11 + $0x18] sm:$0xf]
    %v1097 = vld [vmem:[%s11 + $0x1c] sm:$0xf]
    %v1098 = vld [vmem:[%s11 + $0x20] sm:$0xf]
    %v1099 = vld [vmem:[%s11 + $0x24] sm:$0xf]
    %v1100 = vld [vmem:[%s11 + $0x28] sm:$0xf]
    %v1101 = vld [vmem:[%s11 + $0x2c] sm:$0xf]
    %v1102 = vld [vmem:[%s11 + $0x30] sm:$0xf]
    %v1103 = vld [vmem:[%s11 + $0x34] sm:$0xf]
    %v1104 = vld [vmem:[%s11 + $0x38] sm:$0xf]
    %v1105 = vld [vmem:[%s11 + $0x3c] sm:$0xf]
    %v1106 = vld [vmem:[%s12] sm:$0x1]
    %v1108 = vlaneseq
    %v1109 = vshrl.u32 %v1108, 7
    %v1110 = vsub.s32 0, %v1109
    %v1111 = vrot.slane %v1106, %v1110
    %v1129 = vunpack.c.l.b16 %v1090
    %v1130 = vunpack.c.l.b16 %v1091
    %v1131 = vunpack.c.l.b16 %v1092
    %v1132 = vunpack.c.l.b16 %v1093
    %v1133 = vunpack.c.l.b16 %v1094
    %v1134 = vunpack.c.l.b16 %v1095
    %v1135 = vunpack.c.l.b16 %v1096
    %v1136 = vunpack.c.l.b16 %v1097
    %v1137 = vunpack.c.l.b16 %v1098
    %v1138 = vunpack.c.l.b16 %v1099
    %v1139 = vunpack.c.l.b16 %v1100
    %v1140 = vunpack.c.l.b16 %v1101
    %v1141 = vunpack.c.l.b16 %v1102
    %v1142 = vunpack.c.l.b16 %v1103
    %v1143 = vunpack.c.l.b16 %v1104
    %v1144 = vunpack.c.l.b16 %v1105
    %v1145 = vpack.c.b16 %v1130, %v1129
    %v1146 = vpack.c.b16 %v1132, %v1131
    %v1147 = vpack.c.b16 %v1134, %v1133
    %v1148 = vpack.c.b16 %v1136, %v1135
    %v1149 = vpack.c.b16 %v1138, %v1137
    %v1150 = vpack.c.b16 %v1140, %v1139
    %v1151 = vpack.c.b16 %v1142, %v1141
    %v1152 = vpack.c.b16 %v1144, %v1143
    %1161 = vmatprep.subr.bf16.mxu0 0
    %1162 = vmatpush1.bf16.msra.mxu0 %v1145
    %1163 = vmatprep.subr.bf16.mxu0 0
    %1164 = vmatpush1.bf16.msra.mxu0 %v1146
    %1165 = vmatprep.subr.bf16.mxu0 0
    %1166 = vmatpush1.bf16.msra.mxu0 %v1147
    %1167 = vmatprep.subr.bf16.mxu0 0
    %1168 = vmatpush1.bf16.msra.mxu0 %v1148
    %1169 = vmatprep.subr.bf16.mxu0 0
    %1170 = vmatpush1.bf16.msra.mxu0 %v1149
    %1171 = vmatprep.subr.bf16.mxu0 0
    %1172 = vmatpush1.bf16.msra.mxu0 %v1150
    %1173 = vmatprep.subr.bf16.mxu0 0
    %1174 = vmatpush1.bf16.msra.mxu0 %v1151
    %1175 = vmatprep.subr.bf16.mxu0 0
    %1176 = vmatpush1.bf16.msra.mxu0 %v1152
    %1177 = vmatprep.subr.bf16.mxu0 0
    %1178 = vmatpush1.bf16.msra.mxu0 0
    %1179 = vmatprep.subr.bf16.mxu0 0
    %1180 = vmatpush1.bf16.msra.mxu0 0
    %1181 = vmatprep.subr.bf16.mxu0 0
    %1182 = vmatpush1.bf16.msra.mxu0 0
    %1183 = vmatprep.subr.bf16.mxu0 0
    %1184 = vmatpush1.bf16.msra.mxu0 0
    %1185 = vmatprep.subr.bf16.mxu0 0
    %1186 = vmatpush1.bf16.msra.mxu0 0
    %1187 = vmatprep.subr.bf16.mxu0 0
    %1188 = vmatpush1.bf16.msra.mxu0 0
    %1189 = vmatprep.subr.bf16.mxu0 0
    %1190 = vmatpush1.bf16.msra.mxu0 0
    %1191 = vmatprep.subr.bf16.mxu0 0
    %1192 = vmatpush1.bf16.msra.mxu0 0
    %1193 = vmatprep.mubr.bf16.mxu0 0
    %1194 = vmatmul.mubr.bf16.gmra.mrb[0].mxu0 %v1089
    %v1195 = vpop.f32.mrb[0].mxu0
    %v1196 = vadd.f32 %v1111, %v1195
    %v1197 = vpop.f32.mrb[0].mxu0
    %v1198 = vpop.f32.mrb[0].mxu0
    %v1199 = vpop.f32.mrb[0].mxu0
    %1200 = vdwg.mxu0
    %v1201 = vsub.f32 0.0, %v1196
    %v1202 = vmul.f32 %v1201, 1.442695
    %v1203 = vpow.pop %v1202
    %v1204 = vadd.f32 %v1203, 1.0
    %v1205 = vrcp.pop %v1204
    %v1206 = vpack.c.bf16 %v1205, %v1205
    %1207 = vst [vmem:[%s13] sm:$0xf] %v1206
    // Predicated region
    $region86: #{neural_net_forward.1} parent=1 // pred_check
      _
    $region87: #{neural_net_forward.1} parent=1 // pred_check_branch
      %1209 = sbr.rel (0) target = $region89
    $region88: #{neural_net_forward.1} parent=1 // pred_region
      _
    $region89: #{neural_net_forward.1} parent=1 // pred_fallthru
      _
    // Predicated region
    $region90: #{neural_net_forward.1} parent=1 // pred_check
      _
    $region91: #{neural_net_forward.1} parent=1 // pred_check_branch
      %1211 = sbr.rel (0) target = $region93
    $region92: #{neural_net_forward.1} parent=1 // pred_region
      _
    $region93: #{neural_net_forward.1} parent=1 // pred_fallthru
      _
    %1212 = vsyncpa [#allocation3], 1
    %1213 = vsyncpa [#allocation5], 1
    %1214 = vsyncpa [#allocation8], 1
    %1215 = vsyncpa [#allocation11], 1
    %1216 = vsyncpa [#allocation14], 1

</llo_original>
